<compile_context>
chip_gen: v7x
topology: tpu7x:2x2x1
jax: 0.10.0
libtpu: 0.0.40
codegen_flags: <defaults>
</compile_context>

<pallas_src>
import functools
import math

import jax
import jax.numpy as jnp
from jax.experimental import pallas as pl
from jax.experimental.pallas import tpu as pltpu


def _round_up(x, n):
    return ((x + n - 1) // n) * n


def cell_kernel(x_ref, w0_ref, b0_ref, w1_ref, b1_ref, wtt_ref, wtb_ref, bt_ref, o_ref,
                *, isize_p, mxu_dtype):
    # x block: (tm, isize_p), already in mxu_dtype (cast done wrapper-side).
    x = x_ref[...]

    # net0: Linear(isize, isize*(num_node-1)) + ReLU   (f32 accumulate / f32 elementwise)
    out = jnp.dot(x, w0_ref[...], preferred_element_type=jnp.float32) + b0_ref[...]
    out = jnp.maximum(out, 0.0)                                      # (tm, d0_p) f32

    # Single cast of the largest intermediate; reused by both consumers.
    out_m = out.astype(mxu_dtype)

    # net1: Linear(isize, isize) + ReLU on the first isize columns.  The slice is
    # lane-aligned (isize_p % 128 == 0); columns isize..isize_p-1 are killed by the
    # zero-padded rows of W1.
    h = jnp.dot(out_m[:, :isize_p], w1_ref[...],
                preferred_element_type=jnp.float32) + b1_ref[...]
    h = jnp.maximum(h, 0.0)                                          # (tm, isize_p) f32

    # trans: Linear(isize*num_node, isize) on cat([out, h], -1), realized as two
    # accumulating matmuls (no concatenate copy).
    y = jnp.dot(out_m, wtt_ref[...], preferred_element_type=jnp.float32)
    y = y + jnp.dot(h.astype(mxu_dtype), wtb_ref[...], preferred_element_type=jnp.float32)
    y = y + bt_ref[...]

    o_ref[...] = y.astype(o_ref.dtype)


def cell_forward(x, params, num_node, tm=256, mxu_dtype=None):
    """x: (..., isize). Returns same shape / dtype as x."""
    w0, b0, w1, b1, wt, bt = params
    if num_node < 2:
        raise ValueError("num_node must be >= 2 (d0 = isize*(num_node-1) would be 0)")

    orig_shape = x.shape
    isize = orig_shape[-1]
    d0 = isize * (num_node - 1)

    if mxu_dtype is None:
        # f32 on the MXU is multi-pass emulation (v5e/v6e) / unsupported (v7x);
        # bf16 operands with f32 accumulation is the fast path.
        mxu_dtype = jnp.bfloat16 if x.dtype == jnp.float32 else x.dtype
    mxu_dtype = jnp.dtype(mxu_dtype)
    f32 = jnp.float32
    out_dtype = jnp.dtype(x.dtype)

    m = math.prod(orig_shape[:-1])
    x2 = x.reshape(m, isize)

    # ---- lane/sublane-dense layout plumbing (zero padding only; exact) -----
    isize_p = _round_up(isize, 128)
    d0_p = _round_up(d0, 128)
    m8 = _round_up(m, 8)

    if isize_p != isize or m8 != m:
        xp = jnp.zeros((m8, isize_p), mxu_dtype).at[:m, :isize].set(x2.astype(mxu_dtype))
    elif x2.dtype != mxu_dtype:
        xp = x2.astype(mxu_dtype)          # fuses into x's producer under jit
    else:
        xp = x2                            # no copy at all
    m_rows = xp.shape[0]

    def pad2(a, r, c):                     # weight: (in, out) -> zero-padded, mxu dtype
        a = a.astype(mxu_dtype)
        if a.shape == (r, c):
            return a
        return jnp.zeros((r, c), mxu_dtype).at[:a.shape[0], :a.shape[1]].set(a)

    def padb(b, c):                        # bias: (1, out) -> zero-padded, f32
        b = b.astype(f32)
        if b.shape[1] == c:
            return b
        return jnp.zeros((1, c), f32).at[:, :b.shape[1]].set(b)

    w0p = pad2(w0, isize_p, d0_p)
    b0p = padb(b0, d0_p)
    w1p = pad2(w1, isize_p, isize_p)
    b1p = padb(b1, isize_p)
    wttp = pad2(wt[:d0], d0_p, isize_p)    # Wt rows for `out`
    wtbp = pad2(wt[d0:], isize_p, isize_p)  # Wt rows for `h`
    btp = padb(bt, isize_p)

    # ---- row tile / grid ----------------------------------------------------
    tm_eff = max(8, (min(tm, m_rows) // 8) * 8)
    # v7x has 2 TensorCores: keep at least 2 "parallel" grid steps when possible.
    if tm_eff > 128 and m_rows > 128 and pl.cdiv(m_rows, tm_eff) < 2:
        tm_eff = 128
    grid = (pl.cdiv(m_rows, tm_eff),)

    # ---- VMEM budget (weights single-buffered, activations double-buffered) --
    itm = mxu_dtype.itemsize
    weight_bytes = (w0p.size + w1p.size + wttp.size + wtbp.size) * itm
    bias_bytes = (b0p.size + b1p.size + btp.size) * 4
    act_bytes = 2 * tm_eff * isize_p * (itm + out_dtype.itemsize)
    interm_bytes = tm_eff * (d0_p * (4 + itm) + isize_p * (8 + itm))
    vmem_needed = weight_bytes + bias_bytes + act_bytes + interm_bytes
    try:
        vmem_cap = pltpu.get_tpu_info().vmem_capacity_bytes
    except Exception:
        vmem_cap = 64 * 1024 * 1024        # conservative (v7x) fallback
    vmem_ceiling = max(vmem_cap - 12 * 1024 * 1024, 16 * 1024 * 1024)
    vmem_limit = int(min(vmem_ceiling, max(int(1.5 * vmem_needed), 32 * 1024 * 1024)))

    flops = 2 * m_rows * (isize_p * d0_p + isize_p * isize_p
                          + d0_p * isize_p + isize_p * isize_p)
    bytes_accessed = (xp.size * itm + weight_bytes + bias_bytes
                      + m_rows * isize_p * out_dtype.itemsize)
    cost = pl.CostEstimate(flops=flops, transcendentals=0, bytes_accessed=bytes_accessed)

    # Resident (constant-index) blocks: single-buffered.
    resident = functools.partial(pl.BlockSpec, index_map=lambda i: (0, 0),
                                 pipeline_mode=pl.Buffered(1))

    out = pl.pallas_call(
        functools.partial(cell_kernel, isize_p=isize_p, mxu_dtype=mxu_dtype),
        out_shape=jax.ShapeDtypeStruct((m_rows, isize_p), out_dtype),
        grid_spec=pltpu.PrefetchScalarGridSpec(
            num_scalar_prefetch=0,
            grid=grid,
            in_specs=[
                pl.BlockSpec((tm_eff, isize_p), lambda i: (i, 0)),   # x rows (lane-dense)
                resident((isize_p, d0_p)),                           # W0
                resident((1, d0_p)),                                 # b0
                resident((isize_p, isize_p)),                        # W1
                resident((1, isize_p)),                              # b1
                resident((d0_p, isize_p)),                           # Wt (top rows)
                resident((isize_p, isize_p)),                        # Wt (bottom rows)
                resident((1, isize_p)),                              # bt
            ],
            out_specs=pl.BlockSpec((tm_eff, isize_p), lambda i: (i, 0)),
        ),
        compiler_params=pltpu.CompilerParams(
            dimension_semantics=("parallel",),
            vmem_limit_bytes=vmem_limit,
        ),
        cost_estimate=cost,
    )(xp, w0p, b0p, w1p, b1p, wttp, wtbp, btp)

    if m_rows != m or isize_p != isize:
        out = out[:m, :isize]
    return out.reshape(orig_shape)


def init_params(key, isize, num_node, dtype=jnp.float32):
    """Deterministic synthetic params, torch-Linear shapes stored transposed (in, out)."""
    d0 = isize * (num_node - 1)
    dcat = isize * num_node
    k0, k1, k2, k3, k4, k5 = jax.random.split(key, 6)
    scale = 1.0 / jnp.sqrt(isize)
    w0 = (jax.random.normal(k0, (isize, d0)) * scale).astype(dtype)
    b0 = (jax.random.normal(k1, (1, d0)) * 0.01).astype(dtype)
    w1 = (jax.random.normal(k2, (isize, isize)) * scale).astype(dtype)
    b1 = (jax.random.normal(k3, (1, isize)) * 0.01).astype(dtype)
    wt = (jax.random.normal(k4, (dcat, isize)) * (1.0 / jnp.sqrt(dcat))).astype(dtype)
    bt = (jax.random.normal(k5, (1, isize)) * 0.01).astype(dtype)
    return (w0, b0, w1, b1, wt, bt)


def cell_reference(x, params, num_node):
    """Pure-JAX reference mirroring the torch forward (f32 math)."""
    w0, b0, w1, b1, wt, bt = params
    x = x.astype(jnp.float32)
    w0, b0, w1, b1, wt, bt = (a.astype(jnp.float32) for a in (w0, b0, w1, b1, wt, bt))
    isize = x.shape[-1]
    out = jnp.maximum(x @ w0 + b0, 0.0)
    h = jnp.maximum(out[..., :isize] @ w1 + b1, 0.0)
    cat = jnp.concatenate([out, h], axis=-1)
    return cat @ wt + bt


if __name__ == "__main__":
    batch, seq, isize, num_node = 2, 8, 32, 4
    key = jax.random.PRNGKey(0)
    kx, kp = jax.random.split(key)
    x = jax.random.normal(kx, (batch, seq, isize), dtype=jnp.float32)
    params = init_params(kp, isize, num_node)
    y_ref = cell_reference(x, params, num_node)

    # 1) default (bf16 MXU operands, f32 accumulation) — looser tolerance.
    y = jax.block_until_ready(cell_forward(x, params, num_node))
    assert y.shape == x.shape
    assert jnp.allclose(y, y_ref, atol=5e-2, rtol=5e-2), "bf16-MXU path mismatch"

    # 2) explicit f32 MXU path — exactness of padding / concat-split logic.
    y32 = jax.block_until_ready(cell_forward(x, params, num_node, mxu_dtype=jnp.float32))
    assert jnp.allclose(y32, y_ref, atol=1e-4, rtol=1e-4), "f32-MXU path mismatch"

    # 3) non-multiple-of-8 row count (row padding path).
    x_odd = jax.random.normal(kx, (3, 5, isize), dtype=jnp.float32)
    y_odd = jax.block_until_ready(cell_forward(x_odd, params, num_node))
    assert jnp.allclose(y_odd, cell_reference(x_odd, params, num_node),
                        atol=5e-2, rtol=5e-2), "odd-row path mismatch"

    # 4) ragged last row tile (grid of 2 with an overhanging block).
    x_big = jax.random.normal(kx, (3, 100, isize), dtype=jnp.float32)
    y_big = jax.block_until_ready(cell_forward(x_big, params, num_node))
    assert jnp.allclose(y_big, cell_reference(x_big, params, num_node),
                        atol=5e-2, rtol=5e-2), "ragged-tile path mismatch"

    # 5) no-copy fast path: lane-dense isize, sublane-aligned rows, bf16 in/out.
    isize2, num_node2 = 128, 3
    params2 = init_params(jax.random.PRNGKey(1), isize2, num_node2)
    x2 = jax.random.normal(jax.random.PRNGKey(2), (2, 8, isize2), dtype=jnp.bfloat16)
    y2 = jax.block_until_ready(cell_forward(x2, params2, num_node2))
    assert jnp.allclose(y2.astype(jnp.float32),
                        cell_reference(x2, params2, num_node2),
                        atol=1e-1, rtol=1e-1), "no-copy bf16 path mismatch"

    print("KERNEL_OK")
</pallas_src>

<mosaic_0001>
module attributes {stable_mosaic.version = 11 : i64} {
  func.func @cell_kernel(%arg0: i32, %arg1: memref<16x128xbf16, #tpu.memory_space<vmem>>, %arg2: memref<128x128xbf16, #tpu.memory_space<vmem>>, %arg3: memref<1x128xf32, #tpu.memory_space<vmem>>, %arg4: memref<128x128xbf16, #tpu.memory_space<vmem>>, %arg5: memref<1x128xf32, #tpu.memory_space<vmem>>, %arg6: memref<128x128xbf16, #tpu.memory_space<vmem>>, %arg7: memref<128x128xbf16, #tpu.memory_space<vmem>>, %arg8: memref<1x128xf32, #tpu.memory_space<vmem>>, %arg9: memref<16x128xf32, #tpu.memory_space<vmem>>) attributes {dimension_semantics = [#tpu.dimension_semantics<parallel>], iteration_bounds = array<i64: 1>, scalar_prefetch = 0 : i64, scratch_operands = 0 : i64, tpu.core_type = #tpu.core_type<tc>, window_params = [{transform_indices = @transform_0, window_bounds = array<i64: 16, 128>}, {pipeline_mode = #tpu.pipeline_mode<synchronous>, transform_indices = @transform_1, window_bounds = array<i64: 128, 128>}, {pipeline_mode = #tpu.pipeline_mode<synchronous>, transform_indices = @transform_2, window_bounds = array<i64: 1, 128>}, {pipeline_mode = #tpu.pipeline_mode<synchronous>, transform_indices = @transform_3, window_bounds = array<i64: 128, 128>}, {pipeline_mode = #tpu.pipeline_mode<synchronous>, transform_indices = @transform_4, window_bounds = array<i64: 1, 128>}, {pipeline_mode = #tpu.pipeline_mode<synchronous>, transform_indices = @transform_5, window_bounds = array<i64: 128, 128>}, {pipeline_mode = #tpu.pipeline_mode<synchronous>, transform_indices = @transform_6, window_bounds = array<i64: 128, 128>}, {pipeline_mode = #tpu.pipeline_mode<synchronous>, transform_indices = @transform_7, window_bounds = array<i64: 1, 128>}, {transform_indices = @transform_8, window_bounds = array<i64: 16, 128>}]} {
    %c0 = arith.constant 0 : index
    %c0_0 = arith.constant 0 : index
    %0 = vector.load %arg1[%c0, %c0_0] : memref<16x128xbf16, #tpu.memory_space<vmem>>, vector<16x128xbf16>
    %c0_1 = arith.constant 0 : index
    %c0_2 = arith.constant 0 : index
    %1 = vector.load %arg2[%c0_1, %c0_2] : memref<128x128xbf16, #tpu.memory_space<vmem>>, vector<128x128xbf16>
    %cst = arith.constant dense<0.000000e+00> : vector<16x128xf32>
    %2 = tpu.matmul %0, %1, %cst {dimension_numbers = #tpu.dot_dimension_numbers<[1], [0], [0], [1], [0, 0, 1, 1], [], []>} : vector<16x128xbf16>, vector<128x128xbf16>, vector<16x128xf32> -> vector<16x128xf32>
    %c0_3 = arith.constant 0 : index
    %c0_4 = arith.constant 0 : index
    %3 = vector.load %arg3[%c0_3, %c0_4] : memref<1x128xf32, #tpu.memory_space<vmem>>, vector<1x128xf32>
    %4 = vector.broadcast %3 : vector<1x128xf32> to vector<16x128xf32>
    %5 = arith.addf %2, %4 : vector<16x128xf32>
    %cst_5 = arith.constant 0.000000e+00 : f32
    %6 = vector.broadcast %cst_5 : f32 to vector<16x128xf32>
    %7 = arith.maximumf %5, %6 : vector<16x128xf32>
    %8 = arith.truncf %7 : vector<16x128xf32> to vector<16x128xbf16>
    %c0_6 = arith.constant 0 : index
    %c0_7 = arith.constant 0 : index
    %9 = vector.load %arg4[%c0_6, %c0_7] : memref<128x128xbf16, #tpu.memory_space<vmem>>, vector<128x128xbf16>
    %cst_8 = arith.constant dense<0.000000e+00> : vector<16x128xf32>
    %10 = tpu.matmul %8, %9, %cst_8 {dimension_numbers = #tpu.dot_dimension_numbers<[1], [0], [0], [1], [0, 0, 1, 1], [], []>} : vector<16x128xbf16>, vector<128x128xbf16>, vector<16x128xf32> -> vector<16x128xf32>
    %c0_9 = arith.constant 0 : index
    %c0_10 = arith.constant 0 : index
    %11 = vector.load %arg5[%c0_9, %c0_10] : memref<1x128xf32, #tpu.memory_space<vmem>>, vector<1x128xf32>
    %12 = vector.broadcast %11 : vector<1x128xf32> to vector<16x128xf32>
    %13 = arith.addf %10, %12 : vector<16x128xf32>
    %cst_11 = arith.constant 0.000000e+00 : f32
    %14 = vector.broadcast %cst_11 : f32 to vector<16x128xf32>
    %15 = arith.maximumf %13, %14 : vector<16x128xf32>
    %c0_12 = arith.constant 0 : index
    %c0_13 = arith.constant 0 : index
    %16 = vector.load %arg6[%c0_12, %c0_13] : memref<128x128xbf16, #tpu.memory_space<vmem>>, vector<128x128xbf16>
    %cst_14 = arith.constant dense<0.000000e+00> : vector<16x128xf32>
    %17 = tpu.matmul %8, %16, %cst_14 {dimension_numbers = #tpu.dot_dimension_numbers<[1], [0], [0], [1], [0, 0, 1, 1], [], []>} : vector<16x128xbf16>, vector<128x128xbf16>, vector<16x128xf32> -> vector<16x128xf32>
    %18 = arith.truncf %15 : vector<16x128xf32> to vector<16x128xbf16>
    %c0_15 = arith.constant 0 : index
    %c0_16 = arith.constant 0 : index
    %19 = vector.load %arg7[%c0_15, %c0_16] : memref<128x128xbf16, #tpu.memory_space<vmem>>, vector<128x128xbf16>
    %cst_17 = arith.constant dense<0.000000e+00> : vector<16x128xf32>
    %20 = tpu.matmul %18, %19, %cst_17 {dimension_numbers = #tpu.dot_dimension_numbers<[1], [0], [0], [1], [0, 0, 1, 1], [], []>} : vector<16x128xbf16>, vector<128x128xbf16>, vector<16x128xf32> -> vector<16x128xf32>
    %21 = arith.addf %17, %20 : vector<16x128xf32>
    %c0_18 = arith.constant 0 : index
    %c0_19 = arith.constant 0 : index
    %22 = vector.load %arg8[%c0_18, %c0_19] : memref<1x128xf32, #tpu.memory_space<vmem>>, vector<1x128xf32>
    %23 = vector.broadcast %22 : vector<1x128xf32> to vector<16x128xf32>
    %24 = arith.addf %21, %23 : vector<16x128xf32>
    %c0_20 = arith.constant 0 : index
    %c0_21 = arith.constant 0 : index
    %25 = vector.load %arg9[%c0_20, %c0_21] : memref<16x128xf32, #tpu.memory_space<vmem>>, vector<16x128xf32>
    tpu.vector_store %arg9[%c0_20, %c0_21], %24 {strides = array<i32>} : memref<16x128xf32, #tpu.memory_space<vmem>>, vector<16x128xf32>,
    return
  }
  func.func @transform_0(%arg0: i32) -> (i32, i32) {
    %c0_i32 = arith.constant 0 : i32
    %c0_i32_0 = arith.constant 0 : i32
    return %arg0, %c0_i32 : i32, i32
  }
  func.func @transform_1(%arg0: i32) -> (i32, i32) {
    %c0_i32 = arith.constant 0 : i32
    %c0_i32_0 = arith.constant 0 : i32
    %c0_i32_1 = arith.constant 0 : i32
    return %c0_i32, %c0_i32_0 : i32, i32
  }
  func.func @transform_2(%arg0: i32) -> (i32, i32) {
    %c0_i32 = arith.constant 0 : i32
    %c0_i32_0 = arith.constant 0 : i32
    %c0_i32_1 = arith.constant 0 : i32
    return %c0_i32, %c0_i32_0 : i32, i32
  }
  func.func @transform_3(%arg0: i32) -> (i32, i32) {
    %c0_i32 = arith.constant 0 : i32
    %c0_i32_0 = arith.constant 0 : i32
    %c0_i32_1 = arith.constant 0 : i32
    return %c0_i32, %c0_i32_0 : i32, i32
  }
  func.func @transform_4(%arg0: i32) -> (i32, i32) {
    %c0_i32 = arith.constant 0 : i32
    %c0_i32_0 = arith.constant 0 : i32
    %c0_i32_1 = arith.constant 0 : i32
    return %c0_i32, %c0_i32_0 : i32, i32
  }
  func.func @transform_5(%arg0: i32) -> (i32, i32) {
    %c0_i32 = arith.constant 0 : i32
    %c0_i32_0 = arith.constant 0 : i32
    %c0_i32_1 = arith.constant 0 : i32
    return %c0_i32, %c0_i32_0 : i32, i32
  }
  func.func @transform_6(%arg0: i32) -> (i32, i32) {
    %c0_i32 = arith.constant 0 : i32
    %c0_i32_0 = arith.constant 0 : i32
    %c0_i32_1 = arith.constant 0 : i32
    return %c0_i32, %c0_i32_0 : i32, i32
  }
  func.func @transform_7(%arg0: i32) -> (i32, i32) {
    %c0_i32 = arith.constant 0 : i32
    %c0_i32_0 = arith.constant 0 : i32
    %c0_i32_1 = arith.constant 0 : i32
    return %c0_i32, %c0_i32_0 : i32, i32
  }
  func.func @transform_8(%arg0: i32) -> (i32, i32) {
    %c0_i32 = arith.constant 0 : i32
    %c0_i32_0 = arith.constant 0 : i32
    return %arg0, %c0_i32 : i32, i32
  }
}

</mosaic_0001>

<llo_original>
// kernel: tpu_custom_call.1
$region0: #{tpu_custom_call.1}
  #allocation0 [shape = 'u32[]', space=smem, size = 0x4, offset = 0x4, fixed_abs, tag = 'smem constant byte address 0x4 - core index']
  #allocation1 [shape = 'u32[144,128]{1,0:T(1,128)}', space=vmem, size = 0x12000, scoped, tag = 'internal scratch']
  %s0 = inlined_call_operand.hbm [shape: bf16[16,128], index: 0, kind: input, shape index: {}]
  %s1 = inlined_call_operand.hbm [shape: bf16[128,128], index: 1, kind: input, shape index: {}]
  %s2 = inlined_call_operand.vmem [shape: f32[1,128], index: 2, kind: input, shape index: {}]
  %s3 = inlined_call_operand.hbm [shape: bf16[128,128], index: 3, kind: input, shape index: {}]
  %s4 = inlined_call_operand.vmem [shape: f32[1,128], index: 4, kind: input, shape index: {}]
  %s5 = inlined_call_operand.hbm [shape: bf16[128,128], index: 5, kind: input, shape index: {}]
  %s6 = inlined_call_operand.hbm [shape: bf16[128,128], index: 6, kind: input, shape index: {}]
  %s7 = inlined_call_operand.vmem [shape: f32[1,128], index: 7, kind: input, shape index: {}]
  %s8 = inlined_call_operand.hbm [shape: f32[16,128], index: 8, kind: output, shape index: {}]
  %s9 = sld [smem:[#allocation0]]
  $region62: #{tpu_custom_call.1} parent=0
    _
  %s11 = ssub.s32 1, %s9
  %s12 = scalar_select 0, %s11, %s9
  $region1: #{tpu_custom_call.1} parent=0
    #allocation2 [shape = 'u8[4096]{0}', space=vmem, size = 0x1000, scoped, tag = 'input window, operand 0, single buffered']
    #allocation3 [shape = 's32[1]{0}', space=sflag, size = 0x4, scoped, tag = 'scoped memory for tpu_custom_call.1']
    #allocation4 [shape = 's32[1]{0}', space=sflag, size = 0x4, scoped, tag = 'scoped memory for tpu_custom_call.1']
    #allocation5 [shape = 'u8[32768]{0}', space=vmem, size = 0x8000, scoped, tag = 'input window, operand 1, single buffered']
    #allocation6 [shape = 's32[1]{0}', space=sflag, size = 0x4, scoped, tag = 'scoped memory for tpu_custom_call.1']
    #allocation7 [shape = 'u8[32768]{0}', space=vmem, size = 0x8000, scoped, tag = 'input window, operand 3, single buffered']
    #allocation8 [shape = 'u8[32768]{0}', space=vmem, size = 0x8000, scoped, tag = 'input window, operand 5, single buffered']
    #allocation9 [shape = 's32[1]{0}', space=sflag, size = 0x4, scoped, tag = 'scoped memory for tpu_custom_call.1']
    #allocation10 [shape = 'u8[32768]{0}', space=vmem, size = 0x8000, scoped, tag = 'input window, operand 6, single buffered']
    #allocation11 [shape = 'u8[8192]{0}', space=vmem, size = 0x2000, scoped, tag = 'output window, operand 0, single buffered']
    %13 = vsyncpa [#allocation3], 0
    %14 = vsyncpa [#allocation6], 0
    %15 = vsyncpa [#allocation9], 0
    %16 = vsyncpa [#allocation4], 0
    // Predicated region
    $region2: #{tpu_custom_call.1} parent=1 // pred_check
      _
    $region3: #{tpu_custom_call.1} parent=1 // pred_check_branch
      %18 = sbr.rel (0) target = $region5
    $region4: #{tpu_custom_call.1} parent=1 // pred_region
      %s20 = ssub.s32 128, 128
      %21 = vsyncadd [#allocation3], %s20
      %s22 = sshll.u32 [#allocation2], 4
      %s23 = int_to_ptr.vmem [resolvable:$true] %s22
      %28 = dma.hbm_to_vmem [thread:$0]  %s0, 128, %s23, [#allocation3], 64, 64, 4
    $region5: #{tpu_custom_call.1} parent=1 // pred_fallthru
      _
    // Predicated region
    $region6: #{tpu_custom_call.1} parent=1 // pred_check
      _
    $region7: #{tpu_custom_call.1} parent=1 // pred_check_branch
      %30 = sbr.rel (0) target = $region9
    $region8: #{tpu_custom_call.1} parent=1 // pred_region
      %s32 = ssub.s32 1024, 1024
      %33 = vsyncadd [#allocation6], %s32
      %s34 = sshll.u32 [#allocation5], 4
      %s35 = int_to_ptr.vmem [resolvable:$true] %s34
      %40 = dma.hbm_to_vmem [thread:$0]  %s1, 1024, %s35, [#allocation6], 64, 64, 4
    $region9: #{tpu_custom_call.1} parent=1 // pred_fallthru
      _
    // Predicated region
    $region10: #{tpu_custom_call.1} parent=1 // pred_check
      _
    $region11: #{tpu_custom_call.1} parent=1 // pred_check_branch
      %42 = sbr.rel (0) target = $region13
    $region12: #{tpu_custom_call.1} parent=1 // pred_region
      _
    $region13: #{tpu_custom_call.1} parent=1 // pred_fallthru
      _
    // Predicated region
    $region14: #{tpu_custom_call.1} parent=1 // pred_check
      _
    $region15: #{tpu_custom_call.1} parent=1 // pred_check_branch
      %44 = sbr.rel (0) target = $region17
    $region16: #{tpu_custom_call.1} parent=1 // pred_region
      %s46 = ssub.s32 1024, 1024
      %47 = vsyncadd [#allocation6], %s46
      %s48 = sshll.u32 [#allocation7], 4
      %s49 = int_to_ptr.vmem [resolvable:$true] %s48
      %54 = dma.hbm_to_vmem [thread:$0]  %s3, 1024, %s49, [#allocation6], 64, 64, 4
    $region17: #{tpu_custom_call.1} parent=1 // pred_fallthru
      _
    // Predicated region
    $region18: #{tpu_custom_call.1} parent=1 // pred_check
      _
    $region19: #{tpu_custom_call.1} parent=1 // pred_check_branch
      %56 = sbr.rel (0) target = $region21
    $region20: #{tpu_custom_call.1} parent=1 // pred_region
      _
    $region21: #{tpu_custom_call.1} parent=1 // pred_fallthru
      _
    // Predicated region
    $region22: #{tpu_custom_call.1} parent=1 // pred_check
      _
    $region23: #{tpu_custom_call.1} parent=1 // pred_check_branch
      %58 = sbr.rel (0) target = $region25
    $region24: #{tpu_custom_call.1} parent=1 // pred_region
      %s60 = ssub.s32 1024, 1024
      %61 = vsyncadd [#allocation9], %s60
      %s62 = sshll.u32 [#allocation8], 4
      %s63 = int_to_ptr.vmem [resolvable:$true] %s62
      %68 = dma.hbm_to_vmem [thread:$0]  %s5, 1024, %s63, [#allocation9], 64, 64, 4
    $region25: #{tpu_custom_call.1} parent=1 // pred_fallthru
      _
    // Predicated region
    $region26: #{tpu_custom_call.1} parent=1 // pred_check
      _
    $region27: #{tpu_custom_call.1} parent=1 // pred_check_branch
      %70 = sbr.rel (0) target = $region29
    $region28: #{tpu_custom_call.1} parent=1 // pred_region
      %s72 = ssub.s32 1024, 1024
      %73 = vsyncadd [#allocation9], %s72
      %s74 = sshll.u32 [#allocation10], 4
      %s75 = int_to_ptr.vmem [resolvable:$true] %s74
      %80 = dma.hbm_to_vmem [thread:$0]  %s6, 1024, %s75, [#allocation9], 64, 64, 4
    $region29: #{tpu_custom_call.1} parent=1 // pred_fallthru
      _
    // Predicated region
    $region30: #{tpu_custom_call.1} parent=1 // pred_check
      _
    $region31: #{tpu_custom_call.1} parent=1 // pred_check_branch
      %82 = sbr.rel (0) target = $region33
    $region32: #{tpu_custom_call.1} parent=1 // pred_region
      _
    $region33: #{tpu_custom_call.1} parent=1 // pred_fallthru
      _
    // Predicated region
    $region34: #{tpu_custom_call.1} parent=1 // pred_check
      _
    $region35: #{tpu_custom_call.1} parent=1 // pred_check_branch
      %84 = sbr.rel (0) target = $region37
    $region36: #{tpu_custom_call.1} parent=1 // pred_region
      %85 = dma.done [#allocation3], 128
    $region37: #{tpu_custom_call.1} parent=1 // pred_fallthru
      _
    // Predicated region
    $region38: #{tpu_custom_call.1} parent=1 // pred_check
      _
    $region39: #{tpu_custom_call.1} parent=1 // pred_check_branch
      %87 = sbr.rel (0) target = $region41
    $region40: #{tpu_custom_call.1} parent=1 // pred_region
      %88 = dma.done [#allocation6], 1024
    $region41: #{tpu_custom_call.1} parent=1 // pred_fallthru
      _
    // Predicated region
    $region42: #{tpu_custom_call.1} parent=1 // pred_check
      _
    $region43: #{tpu_custom_call.1} parent=1 // pred_check_branch
      %90 = sbr.rel (0) target = $region45
    $region44: #{tpu_custom_call.1} parent=1 // pred_region
      %91 = dma.done [#allocation6], 1024
    $region45: #{tpu_custom_call.1} parent=1 // pred_fallthru
      _
    // Predicated region
    $region46: #{tpu_custom_call.1} parent=1 // pred_check
      _
    $region47: #{tpu_custom_call.1} parent=1 // pred_check_branch
      %93 = sbr.rel (0) target = $region49
    $region48: #{tpu_custom_call.1} parent=1 // pred_region
      %94 = dma.done [#allocation9], 1024
    $region49: #{tpu_custom_call.1} parent=1 // pred_fallthru
      _
    // Predicated region
    $region50: #{tpu_custom_call.1} parent=1 // pred_check
      _
    $region51: #{tpu_custom_call.1} parent=1 // pred_check_branch
      %96 = sbr.rel (0) target = $region53
    $region52: #{tpu_custom_call.1} parent=1 // pred_region
      %97 = dma.done [#allocation9], 1024
    $region53: #{tpu_custom_call.1} parent=1 // pred_fallthru
      _
    %v99 = vld [vmem:[#allocation2] sm:$0xf]
    %v100 = vld [vmem:[#allocation2 + $0x4] sm:$0xf]
    %v101 = vld [vmem:[#allocation5] sm:$0xf]
    %v102 = vld [vmem:[#allocation5 + $0x4] sm:$0xf]
    %v103 = vld [vmem:[#allocation5 + $0x8] sm:$0xf]
    %v104 = vld [vmem:[#allocation5 + $0xc] sm:$0xf]
    %v105 = vld [vmem:[#allocation5 + $0x10] sm:$0xf]
    %v106 = vld [vmem:[#allocation5 + $0x14] sm:$0xf]
    %v107 = vld [vmem:[#allocation5 + $0x18] sm:$0xf]
    %v108 = vld [vmem:[#allocation5 + $0x1c] sm:$0xf]
    %v109 = vld [vmem:[#allocation5 + $0x20] sm:$0xf]
    %v110 = vld [vmem:[#allocation5 + $0x24] sm:$0xf]
    %v111 = vld [vmem:[#allocation5 + $0x28] sm:$0xf]
    %v112 = vld [vmem:[#allocation5 + $0x2c] sm:$0xf]
    %v113 = vld [vmem:[#allocation5 + $0x30] sm:$0xf]
    %v114 = vld [vmem:[#allocation5 + $0x34] sm:$0xf]
    %v115 = vld [vmem:[#allocation5 + $0x38] sm:$0xf]
    %v116 = vld [vmem:[#allocation5 + $0x3c] sm:$0xf]
    %v117 = vld [vmem:[%s2] sm:$0x1]
    %v119 = vlaneseq
    %v120 = vshrl.u32 %v119, 7
    %v121 = vsub.s32 0, %v120
    %v122 = vrot.slane %v117, %v121
    %v126 = vunpack.c.l.b16 %v99
    %v127 = vunpack.c.l.b16 %v100
    %v128 = vpack.c.b16 %v127, %v126
    %v146 = vunpack.c.l.b16 %v101
    %v147 = vunpack.c.l.b16 %v102
    %v148 = vunpack.c.l.b16 %v103
    %v149 = vunpack.c.l.b16 %v104
    %v150 = vunpack.c.l.b16 %v105
    %v151 = vunpack.c.l.b16 %v106
    %v152 = vunpack.c.l.b16 %v107
    %v153 = vunpack.c.l.b16 %v108
    %v154 = vunpack.c.l.b16 %v109
    %v155 = vunpack.c.l.b16 %v110
    %v156 = vunpack.c.l.b16 %v111
    %v157 = vunpack.c.l.b16 %v112
    %v158 = vunpack.c.l.b16 %v113
    %v159 = vunpack.c.l.b16 %v114
    %v160 = vunpack.c.l.b16 %v115
    %v161 = vunpack.c.l.b16 %v116
    %v162 = vpack.c.b16 %v147, %v146
    %v163 = vpack.c.b16 %v149, %v148
    %v164 = vpack.c.b16 %v151, %v150
    %v165 = vpack.c.b16 %v153, %v152
    %v166 = vpack.c.b16 %v155, %v154
    %v167 = vpack.c.b16 %v157, %v156
    %v168 = vpack.c.b16 %v159, %v158
    %v169 = vpack.c.b16 %v161, %v160
    %178 = vmatprep.subr.bf16.mxu0 0
    %179 = vmatpush1.bf16.msra.mxu0 %v162
    %180 = vmatprep.subr.bf16.mxu0 0
    %181 = vmatpush1.bf16.msra.mxu0 %v163
    %182 = vmatprep.subr.bf16.mxu0 0
    %183 = vmatpush1.bf16.msra.mxu0 %v164
    %184 = vmatprep.subr.bf16.mxu0 0
    %185 = vmatpush1.bf16.msra.mxu0 %v165
    %186 = vmatprep.subr.bf16.mxu0 0
    %187 = vmatpush1.bf16.msra.mxu0 %v166
    %188 = vmatprep.subr.bf16.mxu0 0
    %189 = vmatpush1.bf16.msra.mxu0 %v167
    %190 = vmatprep.subr.bf16.mxu0 0
    %191 = vmatpush1.bf16.msra.mxu0 %v168
    %192 = vmatprep.subr.bf16.mxu0 0
    %193 = vmatpush1.bf16.msra.mxu0 %v169
    %194 = vmatprep.subr.bf16.mxu0 0
    %195 = vmatpush1.bf16.msra.mxu0 0
    %196 = vmatprep.subr.bf16.mxu0 0
    %197 = vmatpush1.bf16.msra.mxu0 0
    %198 = vmatprep.subr.bf16.mxu0 0
    %199 = vmatpush1.bf16.msra.mxu0 0
    %200 = vmatprep.subr.bf16.mxu0 0
    %201 = vmatpush1.bf16.msra.mxu0 0
    %202 = vmatprep.subr.bf16.mxu0 0
    %203 = vmatpush1.bf16.msra.mxu0 0
    %204 = vmatprep.subr.bf16.mxu0 0
    %205 = vmatpush1.bf16.msra.mxu0 0
    %206 = vmatprep.subr.bf16.mxu0 0
    %207 = vmatpush1.bf16.msra.mxu0 0
    %208 = vmatprep.subr.bf16.mxu0 0
    %209 = vmatpush1.bf16.msra.mxu0 0
    %210 = vmatprep.mubr.bf16.mxu0 0
    %211 = vmatmul.mubr.bf16.gmra.mrb[0].mxu0 %v128
    %v212 = vpop.f32.mrb[0].mxu0
    %v213 = vadd.f32 %v122, %v212
    %v214 = vpop.f32.mrb[0].mxu0
    %v215 = vpop.f32.mrb[0].mxu0
    %v216 = vadd.f32 %v122, %v215
    %v217 = vpop.f32.mrb[0].mxu0
    %218 = vdwg.mxu0
    %v219 = vmax.f32 %v213, 0.0
    %v220 = vmax.f32 %v216, 0.0
    %v221 = vpack.c.bf16 %v220, %v219
    %v222 = vld [vmem:[#allocation7] sm:$0xf]
    %v223 = vld [vmem:[#allocation7 + $0x4] sm:$0xf]
    %v224 = vld [vmem:[#allocation7 + $0x8] sm:$0xf]
    %v225 = vld [vmem:[#allocation7 + $0xc] sm:$0xf]
    %v226 = vld [vmem:[#allocation7 + $0x10] sm:$0xf]
    %v227 = vld [vmem:[#allocation7 + $0x14] sm:$0xf]
    %v228 = vld [vmem:[#allocation7 + $0x18] sm:$0xf]
    %v229 = vld [vmem:[#allocation7 + $0x1c] sm:$0xf]
    %v230 = vld [vmem:[#allocation7 + $0x20] sm:$0xf]
    %v231 = vld [vmem:[#allocation7 + $0x24] sm:$0xf]
    %v232 = vld [vmem:[#allocation7 + $0x28] sm:$0xf]
    %v233 = vld [vmem:[#allocation7 + $0x2c] sm:$0xf]
    %v234 = vld [vmem:[#allocation7 + $0x30] sm:$0xf]
    %v235 = vld [vmem:[#allocation7 + $0x34] sm:$0xf]
    %v236 = vld [vmem:[#allocation7 + $0x38] sm:$0xf]
    %v237 = vld [vmem:[#allocation7 + $0x3c] sm:$0xf]
    %v238 = vld [vmem:[%s4] sm:$0x1]
    %v240 = vlaneseq
    %v241 = vshrl.u32 %v240, 7
    %v242 = vsub.s32 0, %v241
    %v243 = vrot.slane %v238, %v242
    %v261 = vunpack.c.l.b16 %v222
    %v262 = vunpack.c.l.b16 %v223
    %v263 = vunpack.c.l.b16 %v224
    %v264 = vunpack.c.l.b16 %v225
    %v265 = vunpack.c.l.b16 %v226
    %v266 = vunpack.c.l.b16 %v227
    %v267 = vunpack.c.l.b16 %v228
    %v268 = vunpack.c.l.b16 %v229
    %v269 = vunpack.c.l.b16 %v230
    %v270 = vunpack.c.l.b16 %v231
    %v271 = vunpack.c.l.b16 %v232
    %v272 = vunpack.c.l.b16 %v233
    %v273 = vunpack.c.l.b16 %v234
    %v274 = vunpack.c.l.b16 %v235
    %v275 = vunpack.c.l.b16 %v236
    %v276 = vunpack.c.l.b16 %v237
    %v277 = vpack.c.b16 %v262, %v261
    %v278 = vpack.c.b16 %v264, %v263
    %v279 = vpack.c.b16 %v266, %v265
    %v280 = vpack.c.b16 %v268, %v267
    %v281 = vpack.c.b16 %v270, %v269
    %v282 = vpack.c.b16 %v272, %v271
    %v283 = vpack.c.b16 %v274, %v273
    %v284 = vpack.c.b16 %v276, %v275
    %293 = vmatprep.subr.bf16.mxu0 0
    %294 = vmatpush1.bf16.msra.mxu0 %v277
    %295 = vmatprep.subr.bf16.mxu0 0
    %296 = vmatpush1.bf16.msra.mxu0 %v278
    %297 = vmatprep.subr.bf16.mxu0 0
    %298 = vmatpush1.bf16.msra.mxu0 %v279
    %299 = vmatprep.subr.bf16.mxu0 0
    %300 = vmatpush1.bf16.msra.mxu0 %v280
    %301 = vmatprep.subr.bf16.mxu0 0
    %302 = vmatpush1.bf16.msra.mxu0 %v281
    %303 = vmatprep.subr.bf16.mxu0 0
    %304 = vmatpush1.bf16.msra.mxu0 %v282
    %305 = vmatprep.subr.bf16.mxu0 0
    %306 = vmatpush1.bf16.msra.mxu0 %v283
    %307 = vmatprep.subr.bf16.mxu0 0
    %308 = vmatpush1.bf16.msra.mxu0 %v284
    %309 = vmatprep.subr.bf16.mxu0 0
    %310 = vmatpush1.bf16.msra.mxu0 0
    %311 = vmatprep.subr.bf16.mxu0 0
    %312 = vmatpush1.bf16.msra.mxu0 0
    %313 = vmatprep.subr.bf16.mxu0 0
    %314 = vmatpush1.bf16.msra.mxu0 0
    %315 = vmatprep.subr.bf16.mxu0 0
    %316 = vmatpush1.bf16.msra.mxu0 0
    %317 = vmatprep.subr.bf16.mxu0 0
    %318 = vmatpush1.bf16.msra.mxu0 0
    %319 = vmatprep.subr.bf16.mxu0 0
    %320 = vmatpush1.bf16.msra.mxu0 0
    %321 = vmatprep.subr.bf16.mxu0 0
    %322 = vmatpush1.bf16.msra.mxu0 0
    %323 = vmatprep.subr.bf16.mxu0 0
    %324 = vmatpush1.bf16.msra.mxu0 0
    %325 = vmatprep.mubr.bf16.mxu0 0
    %326 = vmatmul.mubr.bf16.gmra.mrb[0].mxu0 %v221
    %v327 = vpop.f32.mrb[0].mxu0
    %v328 = vadd.f32 %v243, %v327
    %v329 = vpop.f32.mrb[0].mxu0
    %v330 = vpop.f32.mrb[0].mxu0
    %v331 = vadd.f32 %v243, %v330
    %v332 = vpop.f32.mrb[0].mxu0
    %333 = vdwg.mxu0
    %v334 = vmax.f32 %v328, 0.0
    %v335 = vmax.f32 %v331, 0.0
    %v336 = vld [vmem:[#allocation8] sm:$0xf]
    %v337 = vld [vmem:[#allocation8 + $0x4] sm:$0xf]
    %v338 = vld [vmem:[#allocation8 + $0x8] sm:$0xf]
    %v339 = vld [vmem:[#allocation8 + $0xc] sm:$0xf]
    %v340 = vld [vmem:[#allocation8 + $0x10] sm:$0xf]
    %v341 = vld [vmem:[#allocation8 + $0x14] sm:$0xf]
    %v342 = vld [vmem:[#allocation8 + $0x18] sm:$0xf]
    %v343 = vld [vmem:[#allocation8 + $0x1c] sm:$0xf]
    %v344 = vld [vmem:[#allocation8 + $0x20] sm:$0xf]
    %v345 = vld [vmem:[#allocation8 + $0x24] sm:$0xf]
    %v346 = vld [vmem:[#allocation8 + $0x28] sm:$0xf]
    %v347 = vld [vmem:[#allocation8 + $0x2c] sm:$0xf]
    %v348 = vld [vmem:[#allocation8 + $0x30] sm:$0xf]
    %v349 = vld [vmem:[#allocation8 + $0x34] sm:$0xf]
    %v350 = vld [vmem:[#allocation8 + $0x38] sm:$0xf]
    %v351 = vld [vmem:[#allocation8 + $0x3c] sm:$0xf]
    %v352 = vpack.c.bf16 %v335, %v334
    %v353 = vld [vmem:[#allocation10] sm:$0xf]
    %v354 = vld [vmem:[#allocation10 + $0x4] sm:$0xf]
    %v355 = vld [vmem:[#allocation10 + $0x8] sm:$0xf]
    %v356 = vld [vmem:[#allocation10 + $0xc] sm:$0xf]
    %v357 = vld [vmem:[#allocation10 + $0x10] sm:$0xf]
    %v358 = vld [vmem:[#allocation10 + $0x14] sm:$0xf]
    %v359 = vld [vmem:[#allocation10 + $0x18] sm:$0xf]
    %v360 = vld [vmem:[#allocation10 + $0x1c] sm:$0xf]
    %v361 = vld [vmem:[#allocation10 + $0x20] sm:$0xf]
    %v362 = vld [vmem:[#allocation10 + $0x24] sm:$0xf]
    %v363 = vld [vmem:[#allocation10 + $0x28] sm:$0xf]
    %v364 = vld [vmem:[#allocation10 + $0x2c] sm:$0xf]
    %v365 = vld [vmem:[#allocation10 + $0x30] sm:$0xf]
    %v366 = vld [vmem:[#allocation10 + $0x34] sm:$0xf]
    %v367 = vld [vmem:[#allocation10 + $0x38] sm:$0xf]
    %v368 = vld [vmem:[#allocation10 + $0x3c] sm:$0xf]
    %v385 = vunpack.c.l.b16 %v353
    %v386 = vunpack.c.l.b16 %v354
    %v387 = vunpack.c.l.b16 %v355
    %v388 = vunpack.c.l.b16 %v356
    %v389 = vunpack.c.l.b16 %v357
    %v390 = vunpack.c.l.b16 %v358
    %v391 = vunpack.c.l.b16 %v359
    %v392 = vunpack.c.l.b16 %v360
    %v393 = vunpack.c.l.b16 %v361
    %v394 = vunpack.c.l.b16 %v362
    %v395 = vunpack.c.l.b16 %v363
    %v396 = vunpack.c.l.b16 %v364
    %v397 = vunpack.c.l.b16 %v365
    %v398 = vunpack.c.l.b16 %v366
    %v399 = vunpack.c.l.b16 %v367
    %v400 = vunpack.c.l.b16 %v368
    %v401 = vpack.c.b16 %v386, %v385
    %v402 = vpack.c.b16 %v388, %v387
    %v403 = vpack.c.b16 %v390, %v389
    %v404 = vpack.c.b16 %v392, %v391
    %v405 = vpack.c.b16 %v394, %v393
    %v406 = vpack.c.b16 %v396, %v395
    %v407 = vpack.c.b16 %v398, %v397
    %v408 = vpack.c.b16 %v400, %v399
    %417 = vmatprep.subr.bf16.mxu0 0
    %418 = vmatpush1.bf16.msra.mxu0 %v401
    %419 = vmatprep.subr.bf16.mxu0 0
    %420 = vmatpush1.bf16.msra.mxu0 %v402
    %421 = vmatprep.subr.bf16.mxu0 0
    %422 = vmatpush1.bf16.msra.mxu0 %v403
    %423 = vmatprep.subr.bf16.mxu0 0
    %424 = vmatpush1.bf16.msra.mxu0 %v404
    %425 = vmatprep.subr.bf16.mxu0 0
    %426 = vmatpush1.bf16.msra.mxu0 %v405
    %427 = vmatprep.subr.bf16.mxu0 0
    %428 = vmatpush1.bf16.msra.mxu0 %v406
    %429 = vmatprep.subr.bf16.mxu0 0
    %430 = vmatpush1.bf16.msra.mxu0 %v407
    %431 = vmatprep.subr.bf16.mxu0 0
    %432 = vmatpush1.bf16.msra.mxu0 %v408
    %433 = vmatprep.subr.bf16.mxu0 0
    %434 = vmatpush1.bf16.msra.mxu0 0
    %435 = vmatprep.subr.bf16.mxu0 0
    %436 = vmatpush1.bf16.msra.mxu0 0
    %437 = vmatprep.subr.bf16.mxu0 0
    %438 = vmatpush1.bf16.msra.mxu0 0
    %439 = vmatprep.subr.bf16.mxu0 0
    %440 = vmatpush1.bf16.msra.mxu0 0
    %441 = vmatprep.subr.bf16.mxu0 0
    %442 = vmatpush1.bf16.msra.mxu0 0
    %443 = vmatprep.subr.bf16.mxu0 0
    %444 = vmatpush1.bf16.msra.mxu0 0
    %445 = vmatprep.subr.bf16.mxu0 0
    %446 = vmatpush1.bf16.msra.mxu0 0
    %447 = vmatprep.subr.bf16.mxu0 0
    %448 = vmatpush1.bf16.msra.mxu0 0
    %449 = vmatprep.mubr.bf16.mxu0 0
    %450 = vmatmul.mubr.bf16.gmra.mrb[0].mxu0 %v352
    %v451 = vpop.f32.mrb[0].mxu0
    %v452 = vadd.f32 0.0, %v451
    %v453 = vpop.f32.mrb[0].mxu0
    %v454 = vpop.f32.mrb[0].mxu0
    %v455 = vadd.f32 0.0, %v454
    %v456 = vpop.f32.mrb[0].mxu0
    %457 = vdwg.mxu0
    %v474 = vunpack.c.l.b16 %v336
    %v475 = vunpack.c.l.b16 %v337
    %v476 = vunpack.c.l.b16 %v338
    %v477 = vunpack.c.l.b16 %v339
    %v478 = vunpack.c.l.b16 %v340
    %v479 = vunpack.c.l.b16 %v341
    %v480 = vunpack.c.l.b16 %v342
    %v481 = vunpack.c.l.b16 %v343
    %v482 = vunpack.c.l.b16 %v344
    %v483 = vunpack.c.l.b16 %v345
    %v484 = vunpack.c.l.b16 %v346
    %v485 = vunpack.c.l.b16 %v347
    %v486 = vunpack.c.l.b16 %v348
    %v487 = vunpack.c.l.b16 %v349
    %v488 = vunpack.c.l.b16 %v350
    %v489 = vunpack.c.l.b16 %v351
    %v490 = vpack.c.b16 %v475, %v474
    %v491 = vpack.c.b16 %v477, %v476
    %v492 = vpack.c.b16 %v479, %v478
    %v493 = vpack.c.b16 %v481, %v480
    %v494 = vpack.c.b16 %v483, %v482
    %v495 = vpack.c.b16 %v485, %v484
    %v496 = vpack.c.b16 %v487, %v486
    %v497 = vpack.c.b16 %v489, %v488
    %506 = vmatprep.subr.bf16.mxu0 0
    %507 = vmatpush1.bf16.msra.mxu0 %v490
    %508 = vmatprep.subr.bf16.mxu0 0
    %509 = vmatpush1.bf16.msra.mxu0 %v491
    %510 = vmatprep.subr.bf16.mxu0 0
    %511 = vmatpush1.bf16.msra.mxu0 %v492
    %512 = vmatprep.subr.bf16.mxu0 0
    %513 = vmatpush1.bf16.msra.mxu0 %v493
    %514 = vmatprep.subr.bf16.mxu0 0
    %515 = vmatpush1.bf16.msra.mxu0 %v494
    %516 = vmatprep.subr.bf16.mxu0 0
    %517 = vmatpush1.bf16.msra.mxu0 %v495
    %518 = vmatprep.subr.bf16.mxu0 0
    %519 = vmatpush1.bf16.msra.mxu0 %v496
    %520 = vmatprep.subr.bf16.mxu0 0
    %521 = vmatpush1.bf16.msra.mxu0 %v497
    %522 = vmatprep.subr.bf16.mxu0 0
    %523 = vmatpush1.bf16.msra.mxu0 0
    %524 = vmatprep.subr.bf16.mxu0 0
    %525 = vmatpush1.bf16.msra.mxu0 0
    %526 = vmatprep.subr.bf16.mxu0 0
    %527 = vmatpush1.bf16.msra.mxu0 0
    %528 = vmatprep.subr.bf16.mxu0 0
    %529 = vmatpush1.bf16.msra.mxu0 0
    %530 = vmatprep.subr.bf16.mxu0 0
    %531 = vmatpush1.bf16.msra.mxu0 0
    %532 = vmatprep.subr.bf16.mxu0 0
    %533 = vmatpush1.bf16.msra.mxu0 0
    %534 = vmatprep.subr.bf16.mxu0 0
    %535 = vmatpush1.bf16.msra.mxu0 0
    %536 = vmatprep.subr.bf16.mxu0 0
    %537 = vmatpush1.bf16.msra.mxu0 0
    %538 = vmatprep.mubr.bf16.mxu0 0
    %539 = vmatmul.mubr.bf16.gmra.mrb[0].mxu0 %v221
    %v540 = vpop.f32.mrb[0].mxu0
    %v541 = vadd.f32 %v452, %v540
    %v542 = vpop.f32.mrb[0].mxu0
    %v543 = vpop.f32.mrb[0].mxu0
    %v544 = vadd.f32 %v455, %v543
    %v545 = vpop.f32.mrb[0].mxu0
    %546 = vdwg.mxu0
    %v547 = vld [vmem:[%s7] sm:$0x1]
    %v549 = vlaneseq
    %v550 = vshrl.u32 %v549, 7
    %v551 = vsub.s32 0, %v550
    %v552 = vrot.slane %v547, %v551
    %v554 = vadd.f32 %v541, %v552
    %v555 = vadd.f32 %v544, %v552
    %556 = vst [vmem:[#allocation11] sm:$0xff] %v554
    %557 = vst [vmem:[#allocation11 + $0x8] sm:$0xff] %v555
    // Predicated region
    $region54: #{tpu_custom_call.1} parent=1 // pred_check
      _
    $region55: #{tpu_custom_call.1} parent=1 // pred_check_branch
      %559 = sbr.rel (0) target = $region57
    $region56: #{tpu_custom_call.1} parent=1 // pred_region
      %s561 = ssub.s32 256, 256
      %562 = vsyncadd [#allocation4], %s561
      %s563 = sshll.u32 [#allocation11], 4
      %s564 = int_to_ptr.vmem [resolvable:$true] %s563
      %569 = dma.vmem_to_hbm [thread:$0]  %s564, 256, %s8, [#allocation4], 128, 128, 8
    $region57: #{tpu_custom_call.1} parent=1 // pred_fallthru
      _
    // Predicated region
    $region58: #{tpu_custom_call.1} parent=1 // pred_check
      _
    $region59: #{tpu_custom_call.1} parent=1 // pred_check_branch
      %571 = sbr.rel (0) target = $region61
    $region60: #{tpu_custom_call.1} parent=1 // pred_region
      %572 = dma.done [#allocation4], 256
    $region61: #{tpu_custom_call.1} parent=1 // pred_fallthru
      _
    %573 = vsyncpa [#allocation3], 1
    %574 = vsyncpa [#allocation6], 1
    %575 = vsyncpa [#allocation9], 1
    %576 = vsyncpa [#allocation4], 1

</llo_original>
